<compile_context>
chip_gen: v7x
topology: tpu7x:2x2x1
jax: 0.10.0
libtpu: 0.0.40
codegen_flags: <defaults>
</compile_context>

<pallas_src>
import functools

import jax
import jax.numpy as jnp
import numpy as np
from jax.experimental import pallas as pl
from jax.experimental.pallas import tpu as pltpu


# ---------------------------------------------------------------------------
# In-kernel helpers.
# ---------------------------------------------------------------------------

def _block_mask(mask, pen, w, block_size, stage_v_ref, stage_h_ref):
    """1 - max_pool2d(mask, bs, stride=1, pad=bs//2)[:h, :w], flattened.

    `mask` is the (T, h*w) sampling mask in {0, 1}.  The pool is separable:
    a vertical pass via flat shifts that are multiples of w, realized as
    static slices of a zero-bordered VMEM staging scratch (0-padding ==
    torch's -inf padding because mask values are non-negative), then a
    horizontal pass whose row-seam masking uses the host-precomputed additive
    penalty rows in `pen` (0 = valid, -2 = would wrap into the neighbor row),
    so each shift costs one broadcast-add + one max.
    """
    t, l = mask.shape
    if block_size == 1:
        return 1.0 - mask

    p = block_size // 2

    # --- vertical pass: row_max[y, x] = max_dy mask[y + dy - p, x] ----------
    lo = p * w                        # zero border before the mask
    hi = (block_size - 1 - p) * w     # zero border after the mask
    if lo > 0:
        stage_v_ref[:, :lo] = jnp.zeros((t, lo), jnp.float32)
    if hi > 0:
        stage_v_ref[:, lo + l:] = jnp.zeros((t, hi), jnp.float32)
    stage_v_ref[:, lo:lo + l] = mask

    row_max = mask                    # dy == p (shift 0) term, no load needed
    for dy in range(block_size):
        if dy == p:
            continue
        row_max = jnp.maximum(row_max, stage_v_ref[:, dy * w:dy * w + l])

    # --- horizontal pass: block_max[y, x] = max_dx row_max[y, x + dx - p] ---
    if p > 0:
        stage_h_ref[:, :p] = jnp.zeros((t, p), jnp.float32)
    if block_size - 1 - p > 0:
        stage_h_ref[:, p + l:] = jnp.zeros((t, block_size - 1 - p), jnp.float32)
    stage_h_ref[:, p:p + l] = row_max

    block_max = row_max               # dx == p (shift 0) term
    for dx in range(block_size):
        if dx == p:
            continue
        view = stage_h_ref[:, dx:dx + l]
        # Penalized (wrapping) values are in {-2, -1}; block_max >= 0 always,
        # so the max never selects them — equivalent to torch's -inf padding.
        block_max = jnp.maximum(block_max, view + pen[dx:dx + 1, :])

    return 1.0 - block_max


def _fused_kernel(pen_ref, m_ref, x_ref, y_ref, sum_ref,
                  stage_v_ref, stage_h_ref, *, w, block_size):
    """Pass 1: block_mask once; emit y = x*block_mask and a per-tile sum."""
    bm = _block_mask(m_ref[...], pen_ref[...], w, block_size,
                     stage_v_ref, stage_h_ref)
    sum_ref[0, 0] = jnp.sum(bm)
    y_ref[...] = (x_ref[...] * bm).astype(y_ref.dtype)


def _scale_kernel(norm_ref, y_ref, o_ref):
    """Pass 2: trivially mem-bound rescale by the global norm factor."""
    o_ref[...] = (y_ref[...] * norm_ref[0]).astype(o_ref.dtype)


# ---------------------------------------------------------------------------
# Host-side helpers.
# ---------------------------------------------------------------------------

def _vmem_budgets():
    """(per-tile VMEM budget bytes, vmem_limit_bytes), generation-aware."""
    try:
        info = pltpu.get_tpu_info()
        cap = int(getattr(info, "vmem_capacity_bytes", 64 << 20))
    except Exception:
        cap = 64 << 20
    if cap >= (100 << 20):            # v5e / v6e: 128 MiB physical VMEM
        return 32 << 20, 64 << 20
    return 12 << 20, 32 << 20         # v7x (64 MiB) or unknown backend


def _pick_tile_rows(bc, *, bytes_per_row, budget_bytes, max_rows=1024,
                    min_steps=2):
    """Largest multiple-of-8 divisor of bc under the VMEM budget.

    Also capped so the "parallel" grid has >= min_steps steps when bc allows
    it (v7x shards the parallel axis across its 2 TensorCores).
    """
    budget_rows = max(8, budget_bytes // max(bytes_per_row, 1))
    cap = min(bc, max_rows, budget_rows)
    if bc >= 8 * min_steps:
        cap = min(cap, (bc // min_steps) // 8 * 8)
    cap = max(cap, min(bc, 8))
    for t in range(int(cap), 0, -1):
        if t % 8 == 0 and bc % t == 0:
            return t
    return bc                         # full-extent block is always legal


def _border_penalty(w, l, block_size):
    """pen[dx, q] = 0 if 0 <= (q % w) + dx - bs//2 < w else -2 (f32)."""
    p = block_size // 2
    col = np.arange(l, dtype=np.int64) % w
    pen = np.zeros((block_size, l), dtype=np.float32)
    for dx in range(block_size):
        sx = dx - p
        invalid = (col + sx < 0) | (col + sx >= w)
        pen[dx, invalid] = -2.0
    return jnp.asarray(pen)


# ---------------------------------------------------------------------------
# Wrappers.
# ---------------------------------------------------------------------------

def dropblock_apply_with_mask(x, sampling_mask, block_size, *, tile_rows=None):
    """DropBlock training path given an explicit {0,1} sampling mask (NCHW)."""
    B, C, H, W = x.shape
    BC, L = B * C, H * W
    BCp = ((BC + 7) // 8) * 8

    # Lane-dense view: H*W maps to the 128-wide lane axis (free reshape).
    x2 = x.reshape(BC, L)
    m2 = sampling_mask.reshape(BC, L).astype(jnp.float32)
    if BCp != BC:
        # Padded rows: mask = 1 -> block_mask = 0 (zero sum contribution),
        # x = 0 -> y = 0; they never affect the real rows or the norm.
        x2 = jnp.concatenate([x2, jnp.zeros((BCp - BC, L), x2.dtype)], axis=0)
        m2 = jnp.concatenate([m2, jnp.ones((BCp - BC, L), jnp.float32)], axis=0)

    budget, vmem_limit = _vmem_budgets()
    if tile_rows is None:
        t1 = _pick_tile_rows(BCp, bytes_per_row=36 * L, budget_bytes=budget)
        t2 = _pick_tile_rows(BCp, bytes_per_row=20 * L, budget_bytes=budget)
    else:
        t1 = t2 = int(tile_rows)
    assert BCp % t1 == 0 and BCp % t2 == 0, "tile_rows must divide padded B*C"

    pen = _border_penalty(W, L, block_size)
    cparams = pltpu.CompilerParams(
        dimension_semantics=("parallel",), vmem_limit_bytes=vmem_limit)

    # ---- Pass 1: pooling computed once; y = x*block_mask + per-tile sums ---
    n1 = BCp // t1
    y2, partials = pl.pallas_call(
        functools.partial(_fused_kernel, w=W, block_size=block_size),
        grid=(n1,),
        in_specs=[pl.BlockSpec((block_size, L), lambda i: (0, 0)),   # pen
                  pl.BlockSpec((t1, L), lambda i: (i, 0)),           # mask
                  pl.BlockSpec((t1, L), lambda i: (i, 0))],          # x
        out_specs=(pl.BlockSpec((t1, L), lambda i: (i, 0)),          # y
                   pl.BlockSpec((1, 1), lambda i: (i, 0),            # sums
                                memory_space=pltpu.MemorySpace.SMEM)),
        out_shape=(jax.ShapeDtypeStruct((BCp, L), x.dtype),
                   jax.ShapeDtypeStruct((n1, 1), jnp.float32)),
        scratch_shapes=[
            pltpu.VMEM((t1, L + (block_size - 1) * W), jnp.float32),
            pltpu.VMEM((t1, L + block_size - 1), jnp.float32)],
        compiler_params=cparams,
    )(pen, m2, x2)

    # Global normalization (matches torch: sum == 0 -> norm = inf).
    norm = (jnp.float32(BC * L) / jnp.sum(partials)).reshape(1)

    # ---- Pass 2: rescale by the global norm factor -------------------------
    n2 = BCp // t2
    out2 = pl.pallas_call(
        _scale_kernel,
        grid=(n2,),
        in_specs=[pl.BlockSpec((1,), lambda i: (0,),
                               memory_space=pltpu.MemorySpace.SMEM),
                  pl.BlockSpec((t2, L), lambda i: (i, 0))],
        out_specs=pl.BlockSpec((t2, L), lambda i: (i, 0)),
        out_shape=jax.ShapeDtypeStruct((BCp, L), x.dtype),
        compiler_params=cparams,
    )(norm, y2)

    return out2[:BC].reshape(B, C, H, W)


def dropblock_sampling_mask(shape, gamma, seed):
    """The Bernoulli(gamma) sampling mask `dropblock` uses for this seed."""
    key = jax.random.PRNGKey(seed)
    return jax.random.bernoulli(key, gamma, shape).astype(jnp.float32)


def dropblock(x, gamma, seed, *, block_size, training=True, tile_rows=None):
    """Full DropBlock.forward equivalent (x in NCHW).

    # TODO(synk): torch.bernoulli's RNG stream is not reproducible here; the
    # mask is drawn with jax.random.bernoulli (same distribution).  An
    # in-kernel pltpu.prng_* draw would remove the mask's HBM round-trip but
    # does not lower on the interpret/CPU path, so the draw stays host-side.
    """
    if not training or gamma == 0:
        return x
    mask = dropblock_sampling_mask(x.shape, gamma, seed)
    return dropblock_apply_with_mask(x, mask, block_size, tile_rows=tile_rows)


def dropblock_reference(x, sampling_mask, block_size):
    """Pure-JAX reference (mirrors F.max_pool2d + crop) for correctness."""
    p = block_size // 2
    bm = jax.lax.reduce_window(
        sampling_mask, -jnp.inf, jax.lax.max,
        window_dimensions=(1, 1, block_size, block_size),
        window_strides=(1, 1, 1, 1),
        padding=[(0, 0), (0, 0), (p, block_size - 1 - p),
                 (p, block_size - 1 - p)],
    )
    block_mask = 1.0 - bm
    norm = block_mask.size / jnp.sum(block_mask)
    return x * block_mask * norm


if __name__ == "__main__":
    seed = 42
    key = jax.random.PRNGKey(0)
    k1, k2 = jax.random.split(key)

    # Case 1: (2, 4, 16, 16), block_size=3 -> B*C = 8 rows, single tile.
    x1 = jax.random.normal(k1, (2, 4, 16, 16), dtype=jnp.float32)
    out1 = jax.block_until_ready(dropblock(x1, 0.1, seed, block_size=3))
    m1 = dropblock_sampling_mask(x1.shape, 0.1, seed)
    ref1 = dropblock_reference(x1, m1, 3)
    np.testing.assert_allclose(np.asarray(out1), np.asarray(ref1),
                               rtol=1e-5, atol=1e-5)

    # Case 2: (2, 8, 16, 16), block_size=4 (even kernel), tile_rows=8 -> two
    # grid tiles; exercises cross-tile normalization and even-size padding.
    x2 = jax.random.normal(k2, (2, 8, 16, 16), dtype=jnp.float32)
    out2 = jax.block_until_ready(dropblock(x2, 0.15, seed, block_size=4,
                                           tile_rows=8))
    m2 = dropblock_sampling_mask(x2.shape, 0.15, seed)
    ref2 = dropblock_reference(x2, m2, 4)
    np.testing.assert_allclose(np.asarray(out2), np.asarray(ref2),
                               rtol=1e-5, atol=1e-5)

    # Case 3: block_size=1 degenerate pool (block_mask = 1 - mask).
    out3 = jax.block_until_ready(dropblock(x1, 0.1, seed, block_size=1))
    ref3 = dropblock_reference(x1, m1, 1)
    np.testing.assert_allclose(np.asarray(out3), np.asarray(ref3),
                               rtol=1e-5, atol=1e-5)

    # Eval / gamma == 0 passthrough (torch early-return path).
    out4 = dropblock(x1, 0.0, seed, block_size=3)
    np.testing.assert_allclose(np.asarray(out4), np.asarray(x1))

    print("KERNEL_OK")
</pallas_src>

<mosaic_0001>
module attributes {stable_mosaic.version = 11 : i64} {
  func.func @_fused_kernel(%arg0: i32, %arg1: memref<3x256xf32, #tpu.memory_space<vmem>>, %arg2: memref<8x256xf32, #tpu.memory_space<vmem>>, %arg3: memref<8x256xf32, #tpu.memory_space<vmem>>, %arg4: memref<8x256xf32, #tpu.memory_space<vmem>>, %arg5: memref<1x1xf32, #tpu.memory_space<smem>>, %arg6: memref<8x288xf32, #tpu.memory_space<vmem>>, %arg7: memref<8x258xf32, #tpu.memory_space<vmem>>) attributes {dimension_semantics = [#tpu.dimension_semantics<parallel>], iteration_bounds = array<i64: 1>, scalar_prefetch = 0 : i64, scratch_operands = 2 : i64, tpu.core_type = #tpu.core_type<tc>, window_params = [{pipeline_mode = #tpu.pipeline_mode<synchronous>, transform_indices = @transform_0, window_bounds = array<i64: 3, 256>}, {transform_indices = @transform_1, window_bounds = array<i64: 8, 256>}, {transform_indices = @transform_2, window_bounds = array<i64: 8, 256>}, {transform_indices = @transform_3, window_bounds = array<i64: 8, 256>}, {transform_indices = @transform_4, window_bounds = array<i64: 1, 1>}]} {
    %c0 = arith.constant 0 : index
    %c0_0 = arith.constant 0 : index
    %0 = vector.load %arg2[%c0, %c0_0] : memref<8x256xf32, #tpu.memory_space<vmem>>, vector<8x256xf32>
    %c0_1 = arith.constant 0 : index
    %c0_2 = arith.constant 0 : index
    %1 = vector.load %arg1[%c0_1, %c0_2] : memref<3x256xf32, #tpu.memory_space<vmem>>, vector<3x256xf32>
    %cst = arith.constant 0.000000e+00 : f32
    %2 = vector.broadcast %cst : f32 to vector<8x16xf32>
    %c0_3 = arith.constant 0 : index
    %c0_4 = arith.constant 0 : index
    %3 = vector.load %arg6[%c0_3, %c0_4] : memref<8x288xf32, #tpu.memory_space<vmem>>, vector<8x16xf32>
    tpu.vector_store %arg6[%c0_3, %c0_4], %2 {strides = array<i32>} : memref<8x288xf32, #tpu.memory_space<vmem>>, vector<8x16xf32>,
    %cst_5 = arith.constant 0.000000e+00 : f32
    %4 = vector.broadcast %cst_5 : f32 to vector<8x16xf32>
    %c0_6 = arith.constant 0 : index
    %c272 = arith.constant 272 : index
    %5 = vector.load %arg6[%c0_6, %c272] : memref<8x288xf32, #tpu.memory_space<vmem>>, vector<8x16xf32>
    tpu.vector_store %arg6[%c0_6, %c272], %4 {strides = array<i32>} : memref<8x288xf32, #tpu.memory_space<vmem>>, vector<8x16xf32>,
    %c0_7 = arith.constant 0 : index
    %c16 = arith.constant 16 : index
    %6 = vector.load %arg6[%c0_7, %c16] : memref<8x288xf32, #tpu.memory_space<vmem>>, vector<8x256xf32>
    tpu.vector_store %arg6[%c0_7, %c16], %0 {strides = array<i32>} : memref<8x288xf32, #tpu.memory_space<vmem>>, vector<8x256xf32>,
    %c0_8 = arith.constant 0 : index
    %c0_9 = arith.constant 0 : index
    %7 = vector.load %arg6[%c0_8, %c0_9] : memref<8x288xf32, #tpu.memory_space<vmem>>, vector<8x256xf32>
    %8 = arith.maximumf %0, %7 : vector<8x256xf32>
    %c0_10 = arith.constant 0 : index
    %c32 = arith.constant 32 : index
    %9 = vector.load %arg6[%c0_10, %c32] : memref<8x288xf32, #tpu.memory_space<vmem>>, vector<8x256xf32>
    %10 = arith.maximumf %8, %9 : vector<8x256xf32>
    %cst_11 = arith.constant 0.000000e+00 : f32
    %11 = vector.broadcast %cst_11 : f32 to vector<8x1xf32>
    %c0_12 = arith.constant 0 : index
    %c0_13 = arith.constant 0 : index
    %12 = vector.load %arg7[%c0_12, %c0_13] : memref<8x258xf32, #tpu.memory_space<vmem>>, vector<8x1xf32>
    tpu.vector_store %arg7[%c0_12, %c0_13], %11 {strides = array<i32>} : memref<8x258xf32, #tpu.memory_space<vmem>>, vector<8x1xf32>,
    %cst_14 = arith.constant 0.000000e+00 : f32
    %13 = vector.broadcast %cst_14 : f32 to vector<8x1xf32>
    %c0_15 = arith.constant 0 : index
    %c257 = arith.constant 257 : index
    %14 = vector.load %arg7[%c0_15, %c257] : memref<8x258xf32, #tpu.memory_space<vmem>>, vector<8x1xf32>
    tpu.vector_store %arg7[%c0_15, %c257], %13 {strides = array<i32>} : memref<8x258xf32, #tpu.memory_space<vmem>>, vector<8x1xf32>,
    %c0_16 = arith.constant 0 : index
    %c1 = arith.constant 1 : index
    %15 = vector.load %arg7[%c0_16, %c1] : memref<8x258xf32, #tpu.memory_space<vmem>>, vector<8x256xf32>
    tpu.vector_store %arg7[%c0_16, %c1], %10 {strides = array<i32>} : memref<8x258xf32, #tpu.memory_space<vmem>>, vector<8x256xf32>,
    %c0_17 = arith.constant 0 : index
    %c0_18 = arith.constant 0 : index
    %16 = vector.load %arg7[%c0_17, %c0_18] : memref<8x258xf32, #tpu.memory_space<vmem>>, vector<8x256xf32>
    %17 = vector.extract_strided_slice %1 {offsets = [0, 0], sizes = [1, 256], strides = [1, 1]} : vector<3x256xf32> to vector<1x256xf32>
    %18 = vector.broadcast %17 : vector<1x256xf32> to vector<8x256xf32>
    %19 = arith.addf %16, %18 : vector<8x256xf32>
    %20 = arith.maximumf %10, %19 : vector<8x256xf32>
    %c0_19 = arith.constant 0 : index
    %c2 = arith.constant 2 : index
    %21 = vector.load %arg7[%c0_19, %c2] : memref<8x258xf32, #tpu.memory_space<vmem>>, vector<8x256xf32>
    %22 = vector.extract_strided_slice %1 {offsets = [2, 0], sizes = [1, 256], strides = [1, 1]} : vector<3x256xf32> to vector<1x256xf32>
    %23 = vector.broadcast %22 : vector<1x256xf32> to vector<8x256xf32>
    %24 = arith.addf %21, %23 : vector<8x256xf32>
    %25 = arith.maximumf %20, %24 : vector<8x256xf32>
    %cst_20 = arith.constant 1.000000e+00 : f32
    %26 = vector.broadcast %cst_20 : f32 to vector<8x256xf32>
    %27 = arith.subf %26, %25 : vector<8x256xf32>
    %28 = vector.shape_cast %27 : vector<8x256xf32> to vector<1x8x256xf32>
    %cst_21 = arith.constant dense<0.000000e+00> : vector<1xf32>
    %29 = vector.multi_reduction <add>, %28, %cst_21 [1, 2] : vector<1x8x256xf32> to vector<1xf32>
    %30 = vector.shape_cast %29 : vector<1xf32> to vector<1x1x1xf32>
    %31 = vector.extract %30[0, 0, 0] : f32 from vector<1x1x1xf32>
    %c0_22 = arith.constant 0 : index
    %c0_23 = arith.constant 0 : index
    %32 = memref.load %arg5[%c0_22, %c0_23] : memref<1x1xf32, #tpu.memory_space<smem>>
    memref.store %31, %arg5[%c0_22, %c0_23] : memref<1x1xf32, #tpu.memory_space<smem>>
    %c0_24 = arith.constant 0 : index
    %c0_25 = arith.constant 0 : index
    %33 = vector.load %arg3[%c0_24, %c0_25] : memref<8x256xf32, #tpu.memory_space<vmem>>, vector<8x256xf32>
    %34 = arith.mulf %33, %27 : vector<8x256xf32>
    %c0_26 = arith.constant 0 : index
    %c0_27 = arith.constant 0 : index
    %35 = vector.load %arg4[%c0_26, %c0_27] : memref<8x256xf32, #tpu.memory_space<vmem>>, vector<8x256xf32>
    tpu.vector_store %arg4[%c0_26, %c0_27], %34 {strides = array<i32>} : memref<8x256xf32, #tpu.memory_space<vmem>>, vector<8x256xf32>,
    return
  }
  func.func @transform_0(%arg0: i32) -> (i32, i32) {
    %c0_i32 = arith.constant 0 : i32
    %c0_i32_0 = arith.constant 0 : i32
    %c0_i32_1 = arith.constant 0 : i32
    return %c0_i32, %c0_i32_0 : i32, i32
  }
  func.func @transform_1(%arg0: i32) -> (i32, i32) {
    %c0_i32 = arith.constant 0 : i32
    %c0_i32_0 = arith.constant 0 : i32
    return %arg0, %c0_i32 : i32, i32
  }
  func.func @transform_2(%arg0: i32) -> (i32, i32) {
    %c0_i32 = arith.constant 0 : i32
    %c0_i32_0 = arith.constant 0 : i32
    return %arg0, %c0_i32 : i32, i32
  }
  func.func @transform_3(%arg0: i32) -> (i32, i32) {
    %c0_i32 = arith.constant 0 : i32
    %c0_i32_0 = arith.constant 0 : i32
    return %arg0, %c0_i32 : i32, i32
  }
  func.func @transform_4(%arg0: i32) -> (i32, i32) {
    %c0_i32 = arith.constant 0 : i32
    %c0_i32_0 = arith.constant 0 : i32
    return %arg0, %c0_i32 : i32, i32
  }
}

</mosaic_0001>

<llo_original>
// kernel: tpu_custom_call.1
$region0: #{tpu_custom_call.1}
  #allocation0 [shape = 'u32[]', space=smem, size = 0x4, offset = 0x4, fixed_abs, tag = 'smem constant byte address 0x4 - core index']
  #allocation1 [shape = 'u32[144,128]{1,0:T(1,128)}', space=vmem, size = 0x12000, scoped, tag = 'internal scratch']
  #allocation2 [shape = 'f32[8,288]{1,0:T(8,128)}', space=vmem, size = 0x3000, scoped, tag = 'scratch operand']
  #allocation3 [shape = 'f32[8,258]{1,0:T(8,128)}', space=vmem, size = 0x3000, scoped, tag = 'scratch operand']
  %s0 = inlined_call_operand.hbm [shape: f32[3,256], index: 0, kind: input, shape index: {}]
  %s1 = inlined_call_operand.hbm [shape: f32[8,256], index: 1, kind: input, shape index: {}]
  %s2 = inlined_call_operand.hbm [shape: f32[8,256], index: 2, kind: input, shape index: {}]
  %s3 = inlined_call_operand.hbm [shape: f32[8,256], index: 3, kind: output, shape index: {0}]
  %s4 = inlined_call_operand.hbm [shape: f32[1,1], index: 4, kind: output, shape index: {1}]
  %5 = xla_tuple %s3, %s4
  %s6 = sld [smem:[#allocation0]]
  $region42: #{tpu_custom_call.1} parent=0
    _
  %s8 = ssub.s32 1, %s6
  %s9 = scalar_select 0, %s8, %s6
  $region1: #{tpu_custom_call.1} parent=0
    #allocation4 [shape = 'u8[4096]{0}', space=vmem, size = 0x1000, scoped, tag = 'input window, operand 0, single buffered']
    #allocation5 [shape = 's32[1]{0}', space=sflag, size = 0x4, scoped, tag = 'scoped memory for tpu_custom_call.1']
    #allocation6 [shape = 's32[1]{0}', space=sflag, size = 0x4, scoped, tag = 'scoped memory for tpu_custom_call.1']
    #allocation7 [shape = 's32[1]{0}', space=sflag, size = 0x4, scoped, tag = 'scoped memory for tpu_custom_call.1']
    #allocation8 [shape = 'u8[8192]{0}', space=vmem, size = 0x2000, scoped, tag = 'input window, operand 1, single buffered']
    #allocation9 [shape = 's32[1]{0}', space=sflag, size = 0x4, scoped, tag = 'scoped memory for tpu_custom_call.1']
    #allocation10 [shape = 'u8[8192]{0}', space=vmem, size = 0x2000, scoped, tag = 'input window, operand 2, single buffered']
    #allocation11 [shape = 'u8[8192]{0}', space=vmem, size = 0x2000, scoped, tag = 'output window, operand 0, single buffered']
    #allocation12 [shape = 'u8[512]{0}', space=smem, size = 0x200, scoped, tag = 'output window, operand 1, single buffered']
    %10 = vsyncpa [#allocation5], 0
    %11 = vsyncpa [#allocation9], 0
    %12 = vsyncpa [#allocation6], 0
    %13 = vsyncpa [#allocation7], 0
    // Predicated region
    $region2: #{tpu_custom_call.1} parent=1 // pred_check
      _
    $region3: #{tpu_custom_call.1} parent=1 // pred_check_branch
      %15 = sbr.rel (0) target = $region5
    $region4: #{tpu_custom_call.1} parent=1 // pred_region
      %s17 = ssub.s32 128, 128
      %18 = vsyncadd [#allocation5], %s17
      %s20 = sshll.u32 [#allocation4], 4
      %s21 = int_to_ptr.vmem [resolvable:$true] %s20
      %23 = dma.hbm_to_vmem [thread:$0]  %s0, 128, %s21, [#allocation5]
    $region5: #{tpu_custom_call.1} parent=1 // pred_fallthru
      _
    // Predicated region
    $region6: #{tpu_custom_call.1} parent=1 // pred_check
      _
    $region7: #{tpu_custom_call.1} parent=1 // pred_check_branch
      %25 = sbr.rel (0) target = $region9
    $region8: #{tpu_custom_call.1} parent=1 // pred_region
      %s27 = ssub.s32 256, 256
      %28 = vsyncadd [#allocation9], %s27
      %s30 = sshll.u32 [#allocation8], 4
      %s31 = int_to_ptr.vmem [resolvable:$true] %s30
      %33 = dma.hbm_to_vmem [thread:$0]  %s1, 256, %s31, [#allocation9]
    $region9: #{tpu_custom_call.1} parent=1 // pred_fallthru
      _
    // Predicated region
    $region10: #{tpu_custom_call.1} parent=1 // pred_check
      _
    $region11: #{tpu_custom_call.1} parent=1 // pred_check_branch
      %35 = sbr.rel (0) target = $region13
    $region12: #{tpu_custom_call.1} parent=1 // pred_region
      %s37 = ssub.s32 256, 256
      %38 = vsyncadd [#allocation9], %s37
      %s40 = sshll.u32 [#allocation10], 4
      %s41 = int_to_ptr.vmem [resolvable:$true] %s40
      %43 = dma.hbm_to_vmem [thread:$0]  %s2, 256, %s41, [#allocation9]
    $region13: #{tpu_custom_call.1} parent=1 // pred_fallthru
      _
    // Predicated region
    $region14: #{tpu_custom_call.1} parent=1 // pred_check
      _
    $region15: #{tpu_custom_call.1} parent=1 // pred_check_branch
      %45 = sbr.rel (0) target = $region17
    $region16: #{tpu_custom_call.1} parent=1 // pred_region
      %46 = dma.done [#allocation5], 128
    $region17: #{tpu_custom_call.1} parent=1 // pred_fallthru
      _
    // Predicated region
    $region18: #{tpu_custom_call.1} parent=1 // pred_check
      _
    $region19: #{tpu_custom_call.1} parent=1 // pred_check_branch
      %48 = sbr.rel (0) target = $region21
    $region20: #{tpu_custom_call.1} parent=1 // pred_region
      %49 = dma.done [#allocation9], 256
    $region21: #{tpu_custom_call.1} parent=1 // pred_fallthru
      _
    // Predicated region
    $region22: #{tpu_custom_call.1} parent=1 // pred_check
      _
    $region23: #{tpu_custom_call.1} parent=1 // pred_check_branch
      %51 = sbr.rel (0) target = $region25
    $region24: #{tpu_custom_call.1} parent=1 // pred_region
      %52 = dma.done [#allocation9], 256
    $region25: #{tpu_custom_call.1} parent=1 // pred_fallthru
      _
    %v53 = vld [vmem:[#allocation8] sm:$0xff]
    %v54 = vld [vmem:[#allocation8 + $0x8] sm:$0xff]
    %v55 = vld [vmem:[#allocation4] sm:$0x77]
    %vm56 = vcmask 130048
    %57 = vst.msk [vmem:[#allocation2] sm:$0xff] %vm56, 0.0
    %vm58 = vcmask 261248
    %59 = vst.msk [vmem:[#allocation2 + $0x10] sm:$0xff] %vm58, 0.0
    %62 = vrot.lane.b32.xlu0 %v53, 16
    %v63 = vpop.permute.xlu0 %62
    %64 = vrot.lane.b32.xlu0 %v54, 16
    %v65 = vpop.permute.xlu0 %64
    %v66 = vsel %vm56, %v63, %v65
    %vm70 = vcmask 1047680
    %71 = vst.msk [vmem:[#allocation2] sm:$0xff] %vm70, %v63
    %72 = vst [vmem:[#allocation2 + $0x8] sm:$0xff] %v66
    %73 = vst.msk [vmem:[#allocation2 + $0x10] sm:$0xff] %vm56, %v65
    %v74 = vld [vmem:[#allocation2] sm:$0xff]
    %v75 = vld [vmem:[#allocation2 + $0x8] sm:$0xff]
    %v76 = vmax.f32 %v53, %v74
    %v77 = vmax.f32 %v54, %v75
    %v78 = vld [vmem:[#allocation2 + $0x10] sm:$0xff]
    %82 = vrot.lane.b32.xlu0 %v74, 96
    %v83 = vpop.permute.xlu0 %82
    %84 = vrot.lane.b32.xlu0 %v75, 96
    %v85 = vpop.permute.xlu0 %84
    %86 = vrot.lane.b32.xlu0 %v78, 96
    %v87 = vpop.permute.xlu0 %86
    %vm88 = vcmask 785408
    %v89 = vsel %vm88, %v83, %v85
    %v90 = vsel %vm88, %v85, %v87
    %v93 = vmax.f32 %v76, %v89
    %v94 = vmax.f32 %v77, %v90
    %vm95 = vcmask 7168
    %96 = vst.msk [vmem:[#allocation3] sm:$0xff] %vm95, 0.0
    %vm97 = vcmask 15368
    %98 = vst.msk [vmem:[#allocation3 + $0x10] sm:$0xff] %vm97, 0.0
    %101 = vrot.lane.b32.xlu0 %v93, 1
    %v102 = vpop.permute.xlu0 %101
    %103 = vrot.lane.b32.xlu0 %v94, 1
    %v104 = vpop.permute.xlu0 %103
    %v105 = vsel %vm95, %v102, %v104
    %vm109 = vcmask 1047560
    %110 = vst.msk [vmem:[#allocation3] sm:$0xff] %vm109, %v102
    %111 = vst [vmem:[#allocation3 + $0x8] sm:$0xff] %v105
    %112 = vst.msk [vmem:[#allocation3 + $0x10] sm:$0xff] %vm95, %v104
    %v113 = vld [vmem:[#allocation3] sm:$0xff]
    %v114 = vld [vmem:[#allocation3 + $0x8] sm:$0xff]
    %v116 = vlaneseq
    %v117 = vshrl.u32 %v116, 7
    %v118 = vsub.s32 0, %v117
    %v119 = vrot.slane %v55, %v118
    %v120 = vlaneseq
    %v121 = vshrl.u32 %v120, 7
    %v122 = vsub.s32 4, %v121
    %v123 = vrot.slane %v55, %v122
    %v126 = vlaneseq
    %v127 = vshrl.u32 %v126, 7
    %v128 = vsub.s32 0, %v127
    %v129 = vrot.slane %v119, %v128
    %v130 = vlaneseq
    %v131 = vshrl.u32 %v130, 7
    %v132 = vsub.s32 0, %v131
    %v133 = vrot.slane %v123, %v132
    %v134 = vadd.f32 %v113, %v129
    %v135 = vadd.f32 %v114, %v133
    %v136 = vmax.f32 %v93, %v134
    %v137 = vmax.f32 %v94, %v135
    %v138 = vld [vmem:[#allocation3 + $0x10] sm:$0xff]
    %v139 = vlaneseq
    %v140 = vshrl.u32 %v139, 7
    %v141 = vsub.s32 2, %v140
    %v142 = vrot.slane %v55, %v141
    %v143 = vlaneseq
    %v144 = vshrl.u32 %v143, 7
    %v145 = vsub.s32 6, %v144
    %v146 = vrot.slane %v55, %v145
    %v149 = vlaneseq
    %v150 = vshrl.u32 %v149, 7
    %v151 = vsub.s32 2, %v150
    %v152 = vrot.slane %v142, %v151
    %v153 = vlaneseq
    %v154 = vshrl.u32 %v153, 7
    %v155 = vsub.s32 2, %v154
    %v156 = vrot.slane %v146, %v155
    %159 = vrot.lane.b32.xlu0 %v152, 2
    %v160 = vpop.permute.xlu0 %159
    %161 = vrot.lane.b32.xlu0 %v156, 2
    %v162 = vpop.permute.xlu0 %161
    %vm163 = vcmask 15360
    %v164 = vsel %vm163, %v160, %v162
    %v168 = vadd.f32 %v113, %v160
    %v169 = vadd.f32 %v114, %v164
    %v170 = vadd.f32 %v138, %v162
    %174 = vrot.lane.b32.xlu0 %v168, 126
    %v175 = vpop.permute.xlu0 %174
    %176 = vrot.lane.b32.xlu0 %v169, 126
    %v177 = vpop.permute.xlu0 %176
    %178 = vrot.lane.b32.xlu0 %v170, 126
    %v179 = vpop.permute.xlu0 %178
    %vm180 = vcmask 1031168
    %v181 = vsel %vm180, %v175, %v177
    %v182 = vsel %vm180, %v177, %v179
    %v185 = vmax.f32 %v136, %v181
    %v186 = vmax.f32 %v137, %v182
    %v187 = vsub.f32 1.0, %v185
    %v188 = vsub.f32 1.0, %v186
    %v189 = vadd.f32 %v187, %v188
    %190 = vadd.xlane.f32.xlu0 %v189
    %v191 = vpop.xlane.xlu0 %190
    %v192 = vrot.slane %v191, 4
    %v193 = vadd.f32 %v191, %v192
    %v194 = vrot.slane %v193, 2
    %v195 = vadd.f32 %v193, %v194
    %v196 = vrot.slane %v195, 1
    %v197 = vadd.f32 %v195, %v196
    %s198 = vtos %v197
    %s199 = scalar_lea.smem [#allocation12], 0
    %200 = sst [smem:[%s199]] %s198
    %v201 = vld [vmem:[#allocation10] sm:$0xff]
    %v202 = vld [vmem:[#allocation10 + $0x8] sm:$0xff]
    %v203 = vmul.f32 %v201, %v187
    %v204 = vmul.f32 %v202, %v188
    %205 = vst [vmem:[#allocation11] sm:$0xff] %v203
    %206 = vst [vmem:[#allocation11 + $0x8] sm:$0xff] %v204
    // Predicated region
    $region26: #{tpu_custom_call.1} parent=1 // pred_check
      _
    $region27: #{tpu_custom_call.1} parent=1 // pred_check_branch
      %208 = sbr.rel (0) target = $region29
    $region28: #{tpu_custom_call.1} parent=1 // pred_region
      %s210 = ssub.s32 256, 256
      %211 = vsyncadd [#allocation6], %s210
      %s213 = sshll.u32 [#allocation11], 4
      %s214 = int_to_ptr.vmem [resolvable:$true] %s213
      %216 = dma.vmem_to_hbm [thread:$0]  %s214, 256, %s3, [#allocation6]
    $region29: #{tpu_custom_call.1} parent=1 // pred_fallthru
      _
    // Predicated region
    $region30: #{tpu_custom_call.1} parent=1 // pred_check
      _
    $region31: #{tpu_custom_call.1} parent=1 // pred_check_branch
      %218 = sbr.rel (0) target = $region33
    $region32: #{tpu_custom_call.1} parent=1 // pred_region
      %s220 = ssub.s32 16, 16
      %221 = vsyncadd [#allocation7], %s220
      %224 = dma.smem_to_hbm [#allocation12], 16, %s4, [#allocation7]
    $region33: #{tpu_custom_call.1} parent=1 // pred_fallthru
      _
    // Predicated region
    $region34: #{tpu_custom_call.1} parent=1 // pred_check
      _
    $region35: #{tpu_custom_call.1} parent=1 // pred_check_branch
      %226 = sbr.rel (0) target = $region37
    $region36: #{tpu_custom_call.1} parent=1 // pred_region
      %227 = dma.done [#allocation6], 256
    $region37: #{tpu_custom_call.1} parent=1 // pred_fallthru
      _
    // Predicated region
    $region38: #{tpu_custom_call.1} parent=1 // pred_check
      _
    $region39: #{tpu_custom_call.1} parent=1 // pred_check_branch
      %229 = sbr.rel (0) target = $region41
    $region40: #{tpu_custom_call.1} parent=1 // pred_region
      %230 = dma.done [#allocation7], 16
    $region41: #{tpu_custom_call.1} parent=1 // pred_fallthru
      _
    %231 = sfence
    %232 = vsyncpa [#allocation5], 1
    %233 = vsyncpa [#allocation9], 1
    %234 = vsyncpa [#allocation6], 1
    %235 = vsyncpa [#allocation7], 1

</llo_original>
